<compile_context>
chip_gen: v6e
topology: v6e:2x2x1
jax: 0.10.0
libtpu: 0.0.40
codegen_flags: <defaults>
</compile_context>

<pallas_src>
import functools

import jax
import jax.numpy as jnp
from jax import lax
from jax.experimental import pallas as pl
from jax.experimental.pallas import tpu as pltpu

_SLOT = 8  # sublane-aligned K-slot stride of the stacked matmul operand


# ----------------------------------------------------------------------------
# Fused Inception kernel: one image per grid step, channel-first / flat pixels.
# ----------------------------------------------------------------------------
def _inception_kernel(x_ref, wred_ref, sbred_ref, wbig_ref, sball_ref, o_ref, *,
                      H, W, Cin, Ctot, compute_dtype):
    """
    x_ref    : (1, Cin, H*W)    input image, channel-first, pixels on lanes
    wred_ref : (8, Cin)         fused 1x1 reduce weights [b2a | b3a], 0-padded rows
    sbred_ref: (8, 2)           folded BN scale/bias (cols) for the reduce convs
    wbig_ref : (Ctot, 27*8)     stacked second-stage weights (all 4 branches)
    sball_ref: (Ctot, 2)        per-output-channel folded BN scale/bias
    o_ref    : (1, Ctot, H*W)   concatenated output, lane-dense
    """
    HW = H * W
    cd = compute_dtype
    PAD = pl.cdiv(2 * W + 2, 128) * 128     # lane-aligned halo, >= 2*W + 2

    # Channel-first activations (channels on sublanes, pixels on lanes).
    xc = x_ref[0].astype(cd)                                       # (Cin, HW)
    if Cin < _SLOT:
        xc8 = jnp.concatenate([xc, jnp.zeros((_SLOT - Cin, HW), cd)], axis=0)
    else:
        xc8 = xc

    # Column-shift validity masks (shared by conv taps and the pool).
    col = lax.broadcasted_iota(jnp.int32, (1, HW), 1) % W
    cmask = {dw: jnp.logical_and(col + dw >= 0, col + dw < W)
             for dw in (-2, -1, 1, 2)}

    def shifted(padded, dh, dw):
        # padded[:, PAD + p + dh*W + dw] == map[(r+dh, c+dw)] when the row is
        # in range; out-of-range rows land in the halo.  Columns are masked
        # by the caller (cmask) when dw != 0.
        s = PAD + dh * W + dw
        return padded[:, s:s + HW]

    # ---- stage 1: fused 1x1 reduce convs (b2a | b3a) + BN + ReLU (lane dense).
    red = jnp.dot(wred_ref[...], xc, preferred_element_type=jnp.float32)
    sbred = sbred_ref[...]
    red = jnp.maximum(red * sbred[:, 0:1] + sbred[:, 1:2], 0.0)
    red8 = red.astype(cd)                                          # (8, HW)

    # ---- branch-4 input: 3x3/s1/p1 max pool via shifted flat maps (-inf halo).
    ninf = jnp.full((_SLOT, PAD), -jnp.inf, cd)
    xpad = jnp.concatenate([ninf, xc8, ninf], axis=1)
    pooled8 = xc8                                                  # center tap
    for dh in (-1, 0, 1):
        for dw in (-1, 0, 1):
            if dh == 0 and dw == 0:
                continue
            v = shifted(xpad, dh, dw)
            if dw != 0:
                v = jnp.where(cmask[dw], v, -jnp.inf)
            pooled8 = jnp.maximum(pooled8, v)

    # ---- stage 2: one stacked operand [x | pool(x) | 25 shifted reduce maps]
    # and ONE MXU matmul covering branches 1, 2 (3x3), 3 (5x5) and 4.
    zpad = jnp.zeros((_SLOT, PAD), cd)
    redpad = jnp.concatenate([zpad, red8, zpad], axis=1)           # zero conv halo
    pieces = [xc8, pooled8]
    for kh in range(5):
        for kw in range(5):
            v = shifted(redpad, kh - 2, kw - 2)
            if kw != 2:
                v = jnp.where(cmask[kw - 2], v, 0.0)
            pieces.append(v)
    stacked = jnp.concatenate(pieces, axis=0)                      # (27*8, HW)

    acc = jnp.dot(wbig_ref[...], stacked,
                  preferred_element_type=jnp.float32)              # (Ctot, HW)

    # ---- single BN + ReLU epilogue; lane-dense unmasked store.
    sball = sball_ref[...]
    out = jnp.maximum(acc * sball[:, 0:1] + sball[:, 1:2], 0.0)
    o_ref[0] = out.astype(o_ref.dtype)


# ----------------------------------------------------------------------------
# Weight preparation: fold every branch into the stacked-matmul layout.
# ----------------------------------------------------------------------------
def _prepare_weights(params, compute_dtype):
    w1, s1, b1 = params["b1"]
    w2a, s2a, b2a = params["b2a"]
    w2b, s2b, b2b = params["b2b"]
    w3a, s3a, b3a = params["b3a"]
    w3b, s3b, b3b = params["b3b"]
    w4, s4, b4 = params["b4"]

    Cin, C1 = w1.shape[2], w1.shape[3]
    R3, C3 = w2a.shape[3], w2b.shape[3]
    R5, C5 = w3a.shape[3], w3b.shape[3]
    C4 = w4.shape[3]
    RC = R3 + R5
    Ctot = C1 + C3 + C5 + C4
    Ktot = (2 + 25) * _SLOT
    assert Cin <= _SLOT and RC <= _SLOT, "bump _SLOT for wider reduce channels"

    f32 = jnp.float32
    cd = compute_dtype

    # Stage 1: fused (b2a | b3a) 1x1 reduce, channel-first, padded to _SLOT rows.
    wred = jnp.zeros((_SLOT, Cin), f32)
    wred = wred.at[:R3, :].set(w2a.reshape(Cin, R3).T)
    wred = wred.at[R3:RC, :].set(w3a.reshape(Cin, R5).T)
    sbred = jnp.zeros((_SLOT, 2), f32)
    sbred = sbred.at[:RC, 0].set(jnp.concatenate([s2a, s3a]))
    sbred = sbred.at[:RC, 1].set(jnp.concatenate([b2a, b3a]))

    # Stage 2: single stacked weight matrix acting on
    # [ x | maxpool(x) | 25 shifted reduce maps ]  (each slot = _SLOT K rows).
    wbig = jnp.zeros((Ctot, Ktot), f32)
    wbig = wbig.at[0:C1, 0:Cin].set(w1.reshape(Cin, C1).T)              # branch 1
    wbig = wbig.at[C1 + C3 + C5:Ctot, _SLOT:_SLOT + Cin].set(
        w4.reshape(Cin, C4).T)                                          # branch 4
    for kh in range(5):
        for kw in range(5):
            base = (2 + kh * 5 + kw) * _SLOT
            if 1 <= kh <= 3 and 1 <= kw <= 3:                           # branch 2
                wbig = wbig.at[C1:C1 + C3, base:base + R3].set(
                    w2b[kh - 1, kw - 1].T)
            wbig = wbig.at[C1 + C3:C1 + C3 + C5, base + R3:base + RC].set(
                w3b[kh, kw].T)                                          # branch 3

    sball = jnp.stack([jnp.concatenate([s1, s2b, s3b, s4]),
                       jnp.concatenate([b1, b2b, b3b, b4])], axis=1).astype(f32)

    return wred.astype(cd), sbred, wbig.astype(cd), sball, (Cin, Ctot, Ktot)


# ----------------------------------------------------------------------------
# InceptionBlock forward (single fused pallas_call, NCHW in / NCHW out).
# ----------------------------------------------------------------------------
def inception_block(x_nchw, params, *, compute_dtype=jnp.bfloat16,
                    out_dtype=jnp.float32):
    N, Cin, H, W = x_nchw.shape
    HW = H * W
    wred, sbred, wbig, sball, (Cin_w, Ctot, Ktot) = _prepare_weights(
        params, compute_dtype)
    assert Cin_w == Cin

    # Channel-first flat-pixel view: a free reshape, no pad / cast / transpose
    # passes in the wrapper (the kernel casts and masks in-register).
    x2 = x_nchw.reshape(N, Cin, HW)

    kernel = functools.partial(_inception_kernel, H=H, W=W, Cin=Cin,
                               Ctot=Ctot, compute_dtype=compute_dtype)
    out = pl.pallas_call(
        kernel,
        out_shape=jax.ShapeDtypeStruct((N, Ctot, HW), out_dtype),
        grid=(N,),
        in_specs=[
            pl.BlockSpec((1, Cin, HW), lambda n: (n, 0, 0)),
            pl.BlockSpec((_SLOT, Cin), lambda n: (0, 0)),
            pl.BlockSpec((_SLOT, 2), lambda n: (0, 0)),
            pl.BlockSpec((Ctot, Ktot), lambda n: (0, 0)),
            pl.BlockSpec((Ctot, 2), lambda n: (0, 0)),
        ],
        out_specs=pl.BlockSpec((1, Ctot, HW), lambda n: (n, 0, 0)),
        compiler_params=pltpu.CompilerParams(
            dimension_semantics=("parallel",)),
    )(x2, wred, sbred, wbig, sball)

    return out.reshape(N, Ctot, H, W)           # NCHW, no transpose needed


# ----------------------------------------------------------------------------
# Parameter construction (deterministic, synthetic; BN folded in eval mode)
# ----------------------------------------------------------------------------
def make_convblock_params(key, cin, cout, k):
    kw_, kb_, kg_, kbe_, km_, kv_ = jax.random.split(key, 6)
    w = 0.1 * jax.random.normal(kw_, (k, k, cin, cout), jnp.float32)
    conv_b = 0.1 * jax.random.normal(kb_, (cout,), jnp.float32)
    gamma = 1.0 + 0.1 * jax.random.normal(kg_, (cout,), jnp.float32)
    beta = 0.1 * jax.random.normal(kbe_, (cout,), jnp.float32)
    r_mean = 0.1 * jax.random.normal(km_, (cout,), jnp.float32)
    r_var = 0.5 + jnp.abs(0.1 * jax.random.normal(kv_, (cout,), jnp.float32))
    eps = 1e-5
    scale = gamma / jnp.sqrt(r_var + eps)
    bias = (conv_b - r_mean) * scale + beta
    return w, scale, bias


def make_inception_params(key, in_ch, out_1x1, red_3x3, out_3x3,
                          red_5x5, out_5x5, out_1x1pool):
    keys = jax.random.split(key, 6)
    return {
        "b1": make_convblock_params(keys[0], in_ch, out_1x1, 1),
        "b2a": make_convblock_params(keys[1], in_ch, red_3x3, 1),
        "b2b": make_convblock_params(keys[2], red_3x3, out_3x3, 3),
        "b3a": make_convblock_params(keys[3], in_ch, red_5x5, 1),
        "b3b": make_convblock_params(keys[4], red_5x5, out_5x5, 5),
        "b4": make_convblock_params(keys[5], in_ch, out_1x1pool, 1),
    }


# ----------------------------------------------------------------------------
# Pure-JAX reference (numerical verification)
# ----------------------------------------------------------------------------
def _ref_conv_bn_relu(x, w, s, b, padding):
    y = lax.conv_general_dilated(
        x, w, window_strides=(1, 1),
        padding=[(padding[0], padding[0]), (padding[1], padding[1])],
        dimension_numbers=("NHWC", "HWIO", "NHWC"))
    return jnp.maximum(y * s + b, 0.0)


def inception_block_ref(x_nchw, params):
    x = jnp.transpose(x_nchw, (0, 2, 3, 1))
    w, s, b = params["b1"]
    br1 = _ref_conv_bn_relu(x, w, s, b, (0, 0))
    w, s, b = params["b2a"]
    t = _ref_conv_bn_relu(x, w, s, b, (0, 0))
    w, s, b = params["b2b"]
    br2 = _ref_conv_bn_relu(t, w, s, b, (1, 1))
    w, s, b = params["b3a"]
    t = _ref_conv_bn_relu(x, w, s, b, (0, 0))
    w, s, b = params["b3b"]
    br3 = _ref_conv_bn_relu(t, w, s, b, (2, 2))
    p = lax.reduce_window(x, -jnp.inf, lax.max, (1, 3, 3, 1), (1, 1, 1, 1),
                          [(0, 0), (1, 1), (1, 1), (0, 0)])
    w, s, b = params["b4"]
    br4 = _ref_conv_bn_relu(p, w, s, b, (0, 0))
    out = jnp.concatenate([br1, br2, br3, br4], axis=-1)
    return jnp.transpose(out, (0, 3, 1, 2))


# ----------------------------------------------------------------------------
if __name__ == "__main__":
    key = jax.random.PRNGKey(0)
    kx, kp = jax.random.split(key)

    # Small shapes consistent with the module: N=2, Cin=4, H=W=16.
    N, C, H, W = 2, 4, 16, 16
    out_1x1, red_3x3, out_3x3 = 4, 4, 8
    red_5x5, out_5x5, out_1x1pool = 2, 4, 4

    x = jax.random.normal(kx, (N, C, H, W), jnp.float32)
    params = make_inception_params(kp, C, out_1x1, red_3x3, out_3x3,
                                   red_5x5, out_5x5, out_1x1pool)

    ref = jax.block_until_ready(inception_block_ref(x, params))
    expected_channels = out_1x1 + out_3x3 + out_5x5 + out_1x1pool

    # f32 MXU path: tight check against the XLA reference.
    f32_fn = jax.jit(functools.partial(inception_block,
                                       compute_dtype=jnp.float32))
    out32 = jax.block_until_ready(f32_fn(x, params))
    assert out32.shape == (N, expected_channels, H, W), out32.shape
    assert jnp.allclose(out32, ref, atol=5e-4, rtol=5e-4), \
        float(jnp.max(jnp.abs(out32 - ref)))

    # bf16 MXU path (default: half the operand bytes, native MXU input format).
    bf16_fn = jax.jit(inception_block)
    out16 = jax.block_until_ready(bf16_fn(x, params))
    assert out16.shape == (N, expected_channels, H, W), out16.shape
    assert jnp.allclose(out16, ref, atol=5e-2, rtol=5e-2), \
        float(jnp.max(jnp.abs(out16 - ref)))

    print("KERNEL_OK")
</pallas_src>

<mosaic_0001>
module attributes {stable_mosaic.version = 11 : i64} {
  func.func @_inception_kernel(%arg0: i32, %arg1: memref<1x4x256xf32, #tpu.memory_space<vmem>>, %arg2: memref<8x4xf32, #tpu.memory_space<vmem>>, %arg3: memref<8x2xf32, #tpu.memory_space<vmem>>, %arg4: memref<20x216xf32, #tpu.memory_space<vmem>>, %arg5: memref<20x2xf32, #tpu.memory_space<vmem>>, %arg6: memref<1x20x256xf32, #tpu.memory_space<vmem>>) attributes {dimension_semantics = [#tpu.dimension_semantics<parallel>], iteration_bounds = array<i64: 2>, scalar_prefetch = 0 : i64, scratch_operands = 0 : i64, tpu.core_type = #tpu.core_type<tc>, window_params = [{transform_indices = @transform_0, window_bounds = array<i64: 1, 4, 256>}, {pipeline_mode = #tpu.pipeline_mode<synchronous>, transform_indices = @transform_1, window_bounds = array<i64: 8, 4>}, {pipeline_mode = #tpu.pipeline_mode<synchronous>, transform_indices = @transform_2, window_bounds = array<i64: 8, 2>}, {pipeline_mode = #tpu.pipeline_mode<synchronous>, transform_indices = @transform_3, window_bounds = array<i64: 20, 216>}, {pipeline_mode = #tpu.pipeline_mode<synchronous>, transform_indices = @transform_4, window_bounds = array<i64: 20, 2>}, {transform_indices = @transform_5, window_bounds = array<i64: 1, 20, 256>}]} {
    %c0 = arith.constant 0 : index
    %c0_0 = arith.constant 0 : index
    %c0_1 = arith.constant 0 : index
    %0 = vector.load %arg1[%c0, %c0_0, %c0_1] : memref<1x4x256xf32, #tpu.memory_space<vmem>>, vector<1x4x256xf32>
    %1 = vector.shape_cast %0 : vector<1x4x256xf32> to vector<4x256xf32>
    %cst = arith.constant 0.000000e+00 : f32
    %2 = vector.broadcast %cst : f32 to vector<4x256xf32>
    %3 = tpu.concatenate %1, %2 in 0 : vector<4x256xf32>, vector<4x256xf32> -> vector<8x256xf32>
    %4 = tpu.iota {dimensions = array<i32: 1>} : vector<1x256xi32>
    %c16_i32 = arith.constant 16 : i32
    %c0_i32 = arith.constant 0 : i32
    %5 = arith.cmpi eq, %c16_i32, %c0_i32 : i32
    %c1_i32 = arith.constant 1 : i32
    %6 = arith.select %5, %c1_i32, %c16_i32 : i32
    %7 = vector.broadcast %6 : i32 to vector<1x256xi32>
    %8 = arith.remsi %4, %7 : vector<1x256xi32>
    %c0_i32_2 = arith.constant 0 : i32
    %9 = vector.broadcast %c0_i32_2 : i32 to vector<1x256xi32>
    %10 = arith.cmpi ne, %8, %9 : vector<1x256xi32>
    %c0_i32_3 = arith.constant 0 : i32
    %11 = vector.broadcast %c0_i32_3 : i32 to vector<1x256xi32>
    %12 = arith.cmpi slt, %8, %11 : vector<1x256xi32>
    %c0_i32_4 = arith.constant 0 : i32
    %13 = arith.cmpi slt, %6, %c0_i32_4 : i32
    %14 = vector.broadcast %13 : i1 to vector<1x256xi1>
    %15 = vector.broadcast %14 : vector<1x256xi1> to vector<1x256xi1>
    %16 = arith.xori %12, %15 : vector<1x256xi1>
    %17 = arith.andi %16, %10 : vector<1x256xi1>
    %18 = vector.broadcast %6 : i32 to vector<1x256xi32>
    %19 = arith.addi %8, %18 : vector<1x256xi32>
    %20 = arith.select %17, %19, %8 : vector<1x256xi1>, vector<1x256xi32>
    %c-2_i32 = arith.constant -2 : i32
    %21 = vector.broadcast %c-2_i32 : i32 to vector<1x256xi32>
    %22 = arith.addi %20, %21 : vector<1x256xi32>
    %c0_i32_5 = arith.constant 0 : i32
    %23 = vector.broadcast %c0_i32_5 : i32 to vector<1x256xi32>
    %24 = arith.cmpi sge, %22, %23 : vector<1x256xi32>
    %c-2_i32_6 = arith.constant -2 : i32
    %25 = vector.broadcast %c-2_i32_6 : i32 to vector<1x256xi32>
    %26 = arith.addi %20, %25 : vector<1x256xi32>
    %c16_i32_7 = arith.constant 16 : i32
    %27 = vector.broadcast %c16_i32_7 : i32 to vector<1x256xi32>
    %28 = arith.cmpi slt, %26, %27 : vector<1x256xi32>
    %29 = arith.andi %24, %28 : vector<1x256xi1>
    %c-1_i32 = arith.constant -1 : i32
    %30 = vector.broadcast %c-1_i32 : i32 to vector<1x256xi32>
    %31 = arith.addi %20, %30 : vector<1x256xi32>
    %c0_i32_8 = arith.constant 0 : i32
    %32 = vector.broadcast %c0_i32_8 : i32 to vector<1x256xi32>
    %33 = arith.cmpi sge, %31, %32 : vector<1x256xi32>
    %c-1_i32_9 = arith.constant -1 : i32
    %34 = vector.broadcast %c-1_i32_9 : i32 to vector<1x256xi32>
    %35 = arith.addi %20, %34 : vector<1x256xi32>
    %c16_i32_10 = arith.constant 16 : i32
    %36 = vector.broadcast %c16_i32_10 : i32 to vector<1x256xi32>
    %37 = arith.cmpi slt, %35, %36 : vector<1x256xi32>
    %38 = arith.andi %33, %37 : vector<1x256xi1>
    %c1_i32_11 = arith.constant 1 : i32
    %39 = vector.broadcast %c1_i32_11 : i32 to vector<1x256xi32>
    %40 = arith.addi %20, %39 : vector<1x256xi32>
    %c0_i32_12 = arith.constant 0 : i32
    %41 = vector.broadcast %c0_i32_12 : i32 to vector<1x256xi32>
    %42 = arith.cmpi sge, %40, %41 : vector<1x256xi32>
    %c1_i32_13 = arith.constant 1 : i32
    %43 = vector.broadcast %c1_i32_13 : i32 to vector<1x256xi32>
    %44 = arith.addi %20, %43 : vector<1x256xi32>
    %c16_i32_14 = arith.constant 16 : i32
    %45 = vector.broadcast %c16_i32_14 : i32 to vector<1x256xi32>
    %46 = arith.cmpi slt, %44, %45 : vector<1x256xi32>
    %47 = arith.andi %42, %46 : vector<1x256xi1>
    %c2_i32 = arith.constant 2 : i32
    %48 = vector.broadcast %c2_i32 : i32 to vector<1x256xi32>
    %49 = arith.addi %20, %48 : vector<1x256xi32>
    %c0_i32_15 = arith.constant 0 : i32
    %50 = vector.broadcast %c0_i32_15 : i32 to vector<1x256xi32>
    %51 = arith.cmpi sge, %49, %50 : vector<1x256xi32>
    %c2_i32_16 = arith.constant 2 : i32
    %52 = vector.broadcast %c2_i32_16 : i32 to vector<1x256xi32>
    %53 = arith.addi %20, %52 : vector<1x256xi32>
    %c16_i32_17 = arith.constant 16 : i32
    %54 = vector.broadcast %c16_i32_17 : i32 to vector<1x256xi32>
    %55 = arith.cmpi slt, %53, %54 : vector<1x256xi32>
    %56 = arith.andi %51, %55 : vector<1x256xi1>
    %c0_18 = arith.constant 0 : index
    %c0_19 = arith.constant 0 : index
    %57 = vector.load %arg2[%c0_18, %c0_19] : memref<8x4xf32, #tpu.memory_space<vmem>>, vector<8x4xf32>
    %cst_20 = arith.constant dense<0.000000e+00> : vector<8x256xf32>
    %58 = tpu.matmul %57, %1, %cst_20 {dimension_numbers = #tpu.dot_dimension_numbers<[1], [0], [0], [1], [0, 0, 1, 1], [], []>} : vector<8x4xf32>, vector<4x256xf32>, vector<8x256xf32> -> vector<8x256xf32>
    %c0_21 = arith.constant 0 : index
    %c0_22 = arith.constant 0 : index
    %59 = vector.load %arg3[%c0_21, %c0_22] : memref<8x2xf32, #tpu.memory_space<vmem>>, vector<8x2xf32>
    %60 = vector.extract_strided_slice %59 {offsets = [0, 0], sizes = [8, 1], strides = [1, 1]} : vector<8x2xf32> to vector<8x1xf32>
    %61 = vector.broadcast %60 : vector<8x1xf32> to vector<8x256xf32>
    %62 = arith.mulf %58, %61 : vector<8x256xf32>
    %63 = vector.extract_strided_slice %59 {offsets = [0, 1], sizes = [8, 1], strides = [1, 1]} : vector<8x2xf32> to vector<8x1xf32>
    %64 = vector.broadcast %63 : vector<8x1xf32> to vector<8x256xf32>
    %65 = arith.addf %62, %64 : vector<8x256xf32>
    %cst_23 = arith.constant 0.000000e+00 : f32
    %66 = vector.broadcast %cst_23 : f32 to vector<8x256xf32>
    %67 = arith.maximumf %65, %66 : vector<8x256xf32>
    %cst_24 = arith.constant 0xFF800000 : f32
    %68 = vector.broadcast %cst_24 : f32 to vector<8x128xf32>
    %69 = tpu.concatenate %68, %3, %68 in 1 : vector<8x128xf32>, vector<8x256xf32>, vector<8x128xf32> -> vector<8x512xf32>
    %70 = vector.extract_strided_slice %69 {offsets = [0, 111], sizes = [8, 256], strides = [1, 1]} : vector<8x512xf32> to vector<8x256xf32>
    %cst_25 = arith.constant 0xFF800000 : f32
    %71 = vector.shape_cast %38 : vector<1x256xi1> to vector<1x256xi1>
    %72 = vector.broadcast %71 : vector<1x256xi1> to vector<8x256xi1>
    %73 = vector.broadcast %cst_25 : f32 to vector<8x256xf32>
    %74 = arith.select %72, %70, %73 : vector<8x256xi1>, vector<8x256xf32>
    %75 = arith.maximumf %3, %74 : vector<8x256xf32>
    %76 = vector.extract_strided_slice %69 {offsets = [0, 112], sizes = [8, 256], strides = [1, 1]} : vector<8x512xf32> to vector<8x256xf32>
    %77 = arith.maximumf %75, %76 : vector<8x256xf32>
    %78 = vector.extract_strided_slice %69 {offsets = [0, 113], sizes = [8, 256], strides = [1, 1]} : vector<8x512xf32> to vector<8x256xf32>
    %cst_26 = arith.constant 0xFF800000 : f32
    %79 = vector.shape_cast %47 : vector<1x256xi1> to vector<1x256xi1>
    %80 = vector.broadcast %79 : vector<1x256xi1> to vector<8x256xi1>
    %81 = vector.broadcast %cst_26 : f32 to vector<8x256xf32>
    %82 = arith.select %80, %78, %81 : vector<8x256xi1>, vector<8x256xf32>
    %83 = arith.maximumf %77, %82 : vector<8x256xf32>
    %84 = vector.extract_strided_slice %69 {offsets = [0, 127], sizes = [8, 256], strides = [1, 1]} : vector<8x512xf32> to vector<8x256xf32>
    %cst_27 = arith.constant 0xFF800000 : f32
    %85 = vector.shape_cast %38 : vector<1x256xi1> to vector<1x256xi1>
    %86 = vector.broadcast %85 : vector<1x256xi1> to vector<8x256xi1>
    %87 = vector.broadcast %cst_27 : f32 to vector<8x256xf32>
    %88 = arith.select %86, %84, %87 : vector<8x256xi1>, vector<8x256xf32>
    %89 = arith.maximumf %83, %88 : vector<8x256xf32>
    %90 = vector.extract_strided_slice %69 {offsets = [0, 129], sizes = [8, 256], strides = [1, 1]} : vector<8x512xf32> to vector<8x256xf32>
    %cst_28 = arith.constant 0xFF800000 : f32
    %91 = vector.shape_cast %47 : vector<1x256xi1> to vector<1x256xi1>
    %92 = vector.broadcast %91 : vector<1x256xi1> to vector<8x256xi1>
    %93 = vector.broadcast %cst_28 : f32 to vector<8x256xf32>
    %94 = arith.select %92, %90, %93 : vector<8x256xi1>, vector<8x256xf32>
    %95 = arith.maximumf %89, %94 : vector<8x256xf32>
    %96 = vector.extract_strided_slice %69 {offsets = [0, 143], sizes = [8, 256], strides = [1, 1]} : vector<8x512xf32> to vector<8x256xf32>
    %cst_29 = arith.constant 0xFF800000 : f32
    %97 = vector.shape_cast %38 : vector<1x256xi1> to vector<1x256xi1>
    %98 = vector.broadcast %97 : vector<1x256xi1> to vector<8x256xi1>
    %99 = vector.broadcast %cst_29 : f32 to vector<8x256xf32>
    %100 = arith.select %98, %96, %99 : vector<8x256xi1>, vector<8x256xf32>
    %101 = arith.maximumf %95, %100 : vector<8x256xf32>
    %102 = vector.extract_strided_slice %69 {offsets = [0, 144], sizes = [8, 256], strides = [1, 1]} : vector<8x512xf32> to vector<8x256xf32>
    %103 = arith.maximumf %101, %102 : vector<8x256xf32>
    %104 = vector.extract_strided_slice %69 {offsets = [0, 145], sizes = [8, 256], strides = [1, 1]} : vector<8x512xf32> to vector<8x256xf32>
    %cst_30 = arith.constant 0xFF800000 : f32
    %105 = vector.shape_cast %47 : vector<1x256xi1> to vector<1x256xi1>
    %106 = vector.broadcast %105 : vector<1x256xi1> to vector<8x256xi1>
    %107 = vector.broadcast %cst_30 : f32 to vector<8x256xf32>
    %108 = arith.select %106, %104, %107 : vector<8x256xi1>, vector<8x256xf32>
    %109 = arith.maximumf %103, %108 : vector<8x256xf32>
    %cst_31 = arith.constant 0.000000e+00 : f32
    %110 = vector.broadcast %cst_31 : f32 to vector<8x128xf32>
    %111 = tpu.concatenate %110, %67, %110 in 1 : vector<8x128xf32>, vector<8x256xf32>, vector<8x128xf32> -> vector<8x512xf32>
    %112 = vector.extract_strided_slice %111 {offsets = [0, 94], sizes = [8, 256], strides = [1, 1]} : vector<8x512xf32> to vector<8x256xf32>
    %cst_32 = arith.constant 0.000000e+00 : f32
    %113 = vector.shape_cast %29 : vector<1x256xi1> to vector<1x256xi1>
    %114 = vector.broadcast %113 : vector<1x256xi1> to vector<8x256xi1>
    %115 = vector.broadcast %cst_32 : f32 to vector<8x256xf32>
    %116 = arith.select %114, %112, %115 : vector<8x256xi1>, vector<8x256xf32>
    %117 = vector.extract_strided_slice %111 {offsets = [0, 95], sizes = [8, 256], strides = [1, 1]} : vector<8x512xf32> to vector<8x256xf32>
    %cst_33 = arith.constant 0.000000e+00 : f32
    %118 = vector.shape_cast %38 : vector<1x256xi1> to vector<1x256xi1>
    %119 = vector.broadcast %118 : vector<1x256xi1> to vector<8x256xi1>
    %120 = vector.broadcast %cst_33 : f32 to vector<8x256xf32>
    %121 = arith.select %119, %117, %120 : vector<8x256xi1>, vector<8x256xf32>
    %122 = vector.extract_strided_slice %111 {offsets = [0, 96], sizes = [8, 256], strides = [1, 1]} : vector<8x512xf32> to vector<8x256xf32>
    %123 = vector.extract_strided_slice %111 {offsets = [0, 97], sizes = [8, 256], strides = [1, 1]} : vector<8x512xf32> to vector<8x256xf32>
    %cst_34 = arith.constant 0.000000e+00 : f32
    %124 = vector.shape_cast %47 : vector<1x256xi1> to vector<1x256xi1>
    %125 = vector.broadcast %124 : vector<1x256xi1> to vector<8x256xi1>
    %126 = vector.broadcast %cst_34 : f32 to vector<8x256xf32>
    %127 = arith.select %125, %123, %126 : vector<8x256xi1>, vector<8x256xf32>
    %128 = vector.extract_strided_slice %111 {offsets = [0, 98], sizes = [8, 256], strides = [1, 1]} : vector<8x512xf32> to vector<8x256xf32>
    %cst_35 = arith.constant 0.000000e+00 : f32
    %129 = vector.shape_cast %56 : vector<1x256xi1> to vector<1x256xi1>
    %130 = vector.broadcast %129 : vector<1x256xi1> to vector<8x256xi1>
    %131 = vector.broadcast %cst_35 : f32 to vector<8x256xf32>
    %132 = arith.select %130, %128, %131 : vector<8x256xi1>, vector<8x256xf32>
    %133 = vector.extract_strided_slice %111 {offsets = [0, 110], sizes = [8, 256], strides = [1, 1]} : vector<8x512xf32> to vector<8x256xf32>
    %cst_36 = arith.constant 0.000000e+00 : f32
    %134 = vector.shape_cast %29 : vector<1x256xi1> to vector<1x256xi1>
    %135 = vector.broadcast %134 : vector<1x256xi1> to vector<8x256xi1>
    %136 = vector.broadcast %cst_36 : f32 to vector<8x256xf32>
    %137 = arith.select %135, %133, %136 : vector<8x256xi1>, vector<8x256xf32>
    %138 = vector.extract_strided_slice %111 {offsets = [0, 111], sizes = [8, 256], strides = [1, 1]} : vector<8x512xf32> to vector<8x256xf32>
    %cst_37 = arith.constant 0.000000e+00 : f32
    %139 = vector.shape_cast %38 : vector<1x256xi1> to vector<1x256xi1>
    %140 = vector.broadcast %139 : vector<1x256xi1> to vector<8x256xi1>
    %141 = vector.broadcast %cst_37 : f32 to vector<8x256xf32>
    %142 = arith.select %140, %138, %141 : vector<8x256xi1>, vector<8x256xf32>
    %143 = vector.extract_strided_slice %111 {offsets = [0, 112], sizes = [8, 256], strides = [1, 1]} : vector<8x512xf32> to vector<8x256xf32>
    %144 = vector.extract_strided_slice %111 {offsets = [0, 113], sizes = [8, 256], strides = [1, 1]} : vector<8x512xf32> to vector<8x256xf32>
    %cst_38 = arith.constant 0.000000e+00 : f32
    %145 = vector.shape_cast %47 : vector<1x256xi1> to vector<1x256xi1>
    %146 = vector.broadcast %145 : vector<1x256xi1> to vector<8x256xi1>
    %147 = vector.broadcast %cst_38 : f32 to vector<8x256xf32>
    %148 = arith.select %146, %144, %147 : vector<8x256xi1>, vector<8x256xf32>
    %149 = vector.extract_strided_slice %111 {offsets = [0, 114], sizes = [8, 256], strides = [1, 1]} : vector<8x512xf32> to vector<8x256xf32>
    %cst_39 = arith.constant 0.000000e+00 : f32
    %150 = vector.shape_cast %56 : vector<1x256xi1> to vector<1x256xi1>
    %151 = vector.broadcast %150 : vector<1x256xi1> to vector<8x256xi1>
    %152 = vector.broadcast %cst_39 : f32 to vector<8x256xf32>
    %153 = arith.select %151, %149, %152 : vector<8x256xi1>, vector<8x256xf32>
    %154 = vector.extract_strided_slice %111 {offsets = [0, 126], sizes = [8, 256], strides = [1, 1]} : vector<8x512xf32> to vector<8x256xf32>
    %cst_40 = arith.constant 0.000000e+00 : f32
    %155 = vector.shape_cast %29 : vector<1x256xi1> to vector<1x256xi1>
    %156 = vector.broadcast %155 : vector<1x256xi1> to vector<8x256xi1>
    %157 = vector.broadcast %cst_40 : f32 to vector<8x256xf32>
    %158 = arith.select %156, %154, %157 : vector<8x256xi1>, vector<8x256xf32>
    %159 = vector.extract_strided_slice %111 {offsets = [0, 127], sizes = [8, 256], strides = [1, 1]} : vector<8x512xf32> to vector<8x256xf32>
    %cst_41 = arith.constant 0.000000e+00 : f32
    %160 = vector.shape_cast %38 : vector<1x256xi1> to vector<1x256xi1>
    %161 = vector.broadcast %160 : vector<1x256xi1> to vector<8x256xi1>
    %162 = vector.broadcast %cst_41 : f32 to vector<8x256xf32>
    %163 = arith.select %161, %159, %162 : vector<8x256xi1>, vector<8x256xf32>
    %164 = vector.extract_strided_slice %111 {offsets = [0, 128], sizes = [8, 256], strides = [1, 1]} : vector<8x512xf32> to vector<8x256xf32>
    %165 = vector.extract_strided_slice %111 {offsets = [0, 129], sizes = [8, 256], strides = [1, 1]} : vector<8x512xf32> to vector<8x256xf32>
    %cst_42 = arith.constant 0.000000e+00 : f32
    %166 = vector.shape_cast %47 : vector<1x256xi1> to vector<1x256xi1>
    %167 = vector.broadcast %166 : vector<1x256xi1> to vector<8x256xi1>
    %168 = vector.broadcast %cst_42 : f32 to vector<8x256xf32>
    %169 = arith.select %167, %165, %168 : vector<8x256xi1>, vector<8x256xf32>
    %170 = vector.extract_strided_slice %111 {offsets = [0, 130], sizes = [8, 256], strides = [1, 1]} : vector<8x512xf32> to vector<8x256xf32>
    %cst_43 = arith.constant 0.000000e+00 : f32
    %171 = vector.shape_cast %56 : vector<1x256xi1> to vector<1x256xi1>
    %172 = vector.broadcast %171 : vector<1x256xi1> to vector<8x256xi1>
    %173 = vector.broadcast %cst_43 : f32 to vector<8x256xf32>
    %174 = arith.select %172, %170, %173 : vector<8x256xi1>, vector<8x256xf32>
    %175 = vector.extract_strided_slice %111 {offsets = [0, 142], sizes = [8, 256], strides = [1, 1]} : vector<8x512xf32> to vector<8x256xf32>
    %cst_44 = arith.constant 0.000000e+00 : f32
    %176 = vector.shape_cast %29 : vector<1x256xi1> to vector<1x256xi1>
    %177 = vector.broadcast %176 : vector<1x256xi1> to vector<8x256xi1>
    %178 = vector.broadcast %cst_44 : f32 to vector<8x256xf32>
    %179 = arith.select %177, %175, %178 : vector<8x256xi1>, vector<8x256xf32>
    %180 = vector.extract_strided_slice %111 {offsets = [0, 143], sizes = [8, 256], strides = [1, 1]} : vector<8x512xf32> to vector<8x256xf32>
    %cst_45 = arith.constant 0.000000e+00 : f32
    %181 = vector.shape_cast %38 : vector<1x256xi1> to vector<1x256xi1>
    %182 = vector.broadcast %181 : vector<1x256xi1> to vector<8x256xi1>
    %183 = vector.broadcast %cst_45 : f32 to vector<8x256xf32>
    %184 = arith.select %182, %180, %183 : vector<8x256xi1>, vector<8x256xf32>
    %185 = vector.extract_strided_slice %111 {offsets = [0, 144], sizes = [8, 256], strides = [1, 1]} : vector<8x512xf32> to vector<8x256xf32>
    %186 = vector.extract_strided_slice %111 {offsets = [0, 145], sizes = [8, 256], strides = [1, 1]} : vector<8x512xf32> to vector<8x256xf32>
    %cst_46 = arith.constant 0.000000e+00 : f32
    %187 = vector.shape_cast %47 : vector<1x256xi1> to vector<1x256xi1>
    %188 = vector.broadcast %187 : vector<1x256xi1> to vector<8x256xi1>
    %189 = vector.broadcast %cst_46 : f32 to vector<8x256xf32>
    %190 = arith.select %188, %186, %189 : vector<8x256xi1>, vector<8x256xf32>
    %191 = vector.extract_strided_slice %111 {offsets = [0, 146], sizes = [8, 256], strides = [1, 1]} : vector<8x512xf32> to vector<8x256xf32>
    %cst_47 = arith.constant 0.000000e+00 : f32
    %192 = vector.shape_cast %56 : vector<1x256xi1> to vector<1x256xi1>
    %193 = vector.broadcast %192 : vector<1x256xi1> to vector<8x256xi1>
    %194 = vector.broadcast %cst_47 : f32 to vector<8x256xf32>
    %195 = arith.select %193, %191, %194 : vector<8x256xi1>, vector<8x256xf32>
    %196 = vector.extract_strided_slice %111 {offsets = [0, 158], sizes = [8, 256], strides = [1, 1]} : vector<8x512xf32> to vector<8x256xf32>
    %cst_48 = arith.constant 0.000000e+00 : f32
    %197 = vector.shape_cast %29 : vector<1x256xi1> to vector<1x256xi1>
    %198 = vector.broadcast %197 : vector<1x256xi1> to vector<8x256xi1>
    %199 = vector.broadcast %cst_48 : f32 to vector<8x256xf32>
    %200 = arith.select %198, %196, %199 : vector<8x256xi1>, vector<8x256xf32>
    %201 = vector.extract_strided_slice %111 {offsets = [0, 159], sizes = [8, 256], strides = [1, 1]} : vector<8x512xf32> to vector<8x256xf32>
    %cst_49 = arith.constant 0.000000e+00 : f32
    %202 = vector.shape_cast %38 : vector<1x256xi1> to vector<1x256xi1>
    %203 = vector.broadcast %202 : vector<1x256xi1> to vector<8x256xi1>
    %204 = vector.broadcast %cst_49 : f32 to vector<8x256xf32>
    %205 = arith.select %203, %201, %204 : vector<8x256xi1>, vector<8x256xf32>
    %206 = vector.extract_strided_slice %111 {offsets = [0, 160], sizes = [8, 256], strides = [1, 1]} : vector<8x512xf32> to vector<8x256xf32>
    %207 = vector.extract_strided_slice %111 {offsets = [0, 161], sizes = [8, 256], strides = [1, 1]} : vector<8x512xf32> to vector<8x256xf32>
    %cst_50 = arith.constant 0.000000e+00 : f32
    %208 = vector.shape_cast %47 : vector<1x256xi1> to vector<1x256xi1>
    %209 = vector.broadcast %208 : vector<1x256xi1> to vector<8x256xi1>
    %210 = vector.broadcast %cst_50 : f32 to vector<8x256xf32>
    %211 = arith.select %209, %207, %210 : vector<8x256xi1>, vector<8x256xf32>
    %212 = vector.extract_strided_slice %111 {offsets = [0, 162], sizes = [8, 256], strides = [1, 1]} : vector<8x512xf32> to vector<8x256xf32>
    %cst_51 = arith.constant 0.000000e+00 : f32
    %213 = vector.shape_cast %56 : vector<1x256xi1> to vector<1x256xi1>
    %214 = vector.broadcast %213 : vector<1x256xi1> to vector<8x256xi1>
    %215 = vector.broadcast %cst_51 : f32 to vector<8x256xf32>
    %216 = arith.select %214, %212, %215 : vector<8x256xi1>, vector<8x256xf32>
    %217 = tpu.concatenate %3, %109, %116, %121, %122, %127, %132, %137, %142, %143, %148, %153, %158, %163, %164, %169 in 0 : vector<8x256xf32>, vector<8x256xf32>, vector<8x256xf32>, vector<8x256xf32>, vector<8x256xf32>, vector<8x256xf32>, vector<8x256xf32>, vector<8x256xf32>, vector<8x256xf32>, vector<8x256xf32>, vector<8x256xf32>, vector<8x256xf32>, vector<8x256xf32>, vector<8x256xf32>, vector<8x256xf32>, vector<8x256xf32> -> vector<128x256xf32>
    %218 = tpu.concatenate %174, %179, %184, %185, %190, %195, %200, %205, %206, %211, %216 in 0 : vector<8x256xf32>, vector<8x256xf32>, vector<8x256xf32>, vector<8x256xf32>, vector<8x256xf32>, vector<8x256xf32>, vector<8x256xf32>, vector<8x256xf32>, vector<8x256xf32>, vector<8x256xf32>, vector<8x256xf32> -> vector<88x256xf32>
    %219 = tpu.concatenate %217, %218 in 0 : vector<128x256xf32>, vector<88x256xf32> -> vector<216x256xf32>
    %c0_52 = arith.constant 0 : index
    %c0_53 = arith.constant 0 : index
    %220 = vector.load %arg4[%c0_52, %c0_53] : memref<20x216xf32, #tpu.memory_space<vmem>>, vector<20x216xf32>
    %cst_54 = arith.constant dense<0.000000e+00> : vector<20x256xf32>
    %221 = tpu.matmul %220, %219, %cst_54 {dimension_numbers = #tpu.dot_dimension_numbers<[1], [0], [0], [1], [0, 0, 1, 1], [], []>} : vector<20x216xf32>, vector<216x256xf32>, vector<20x256xf32> -> vector<20x256xf32>
    %c0_55 = arith.constant 0 : index
    %c0_56 = arith.constant 0 : index
    %222 = vector.load %arg5[%c0_55, %c0_56] : memref<20x2xf32, #tpu.memory_space<vmem>>, vector<20x2xf32>
    %223 = vector.extract_strided_slice %222 {offsets = [0, 0], sizes = [20, 1], strides = [1, 1]} : vector<20x2xf32> to vector<20x1xf32>
    %224 = vector.broadcast %223 : vector<20x1xf32> to vector<20x256xf32>
    %225 = arith.mulf %221, %224 : vector<20x256xf32>
    %226 = vector.extract_strided_slice %222 {offsets = [0, 1], sizes = [20, 1], strides = [1, 1]} : vector<20x2xf32> to vector<20x1xf32>
    %227 = vector.broadcast %226 : vector<20x1xf32> to vector<20x256xf32>
    %228 = arith.addf %225, %227 : vector<20x256xf32>
    %cst_57 = arith.constant 0.000000e+00 : f32
    %229 = vector.broadcast %cst_57 : f32 to vector<20x256xf32>
    %230 = arith.maximumf %228, %229 : vector<20x256xf32>
    %c0_58 = arith.constant 0 : index
    %c0_59 = arith.constant 0 : index
    %c0_60 = arith.constant 0 : index
    %231 = vector.load %arg6[%c0_58, %c0_59, %c0_60] : memref<1x20x256xf32, #tpu.memory_space<vmem>>, vector<1x20x256xf32>
    %232 = vector.shape_cast %231 : vector<1x20x256xf32> to vector<20x256xf32>
    %233 = vector.shape_cast %230 : vector<20x256xf32> to vector<1x20x256xf32>
    tpu.vector_store %arg6[%c0_58, %c0_59, %c0_60], %233 {strides = array<i32>} : memref<1x20x256xf32, #tpu.memory_space<vmem>>, vector<1x20x256xf32>,
    return
  }
  func.func @transform_0(%arg0: i32) -> (i32, i32, i32) {
    %c0_i32 = arith.constant 0 : i32
    %c0_i32_0 = arith.constant 0 : i32
    %c0_i32_1 = arith.constant 0 : i32
    return %arg0, %c0_i32, %c0_i32_0 : i32, i32, i32
  }
  func.func @transform_1(%arg0: i32) -> (i32, i32) {
    %c0_i32 = arith.constant 0 : i32
    %c0_i32_0 = arith.constant 0 : i32
    %c0_i32_1 = arith.constant 0 : i32
    return %c0_i32, %c0_i32_0 : i32, i32
  }
  func.func @transform_2(%arg0: i32) -> (i32, i32) {
    %c0_i32 = arith.constant 0 : i32
    %c0_i32_0 = arith.constant 0 : i32
    %c0_i32_1 = arith.constant 0 : i32
    return %c0_i32, %c0_i32_0 : i32, i32
  }
  func.func @transform_3(%arg0: i32) -> (i32, i32) {
    %c0_i32 = arith.constant 0 : i32
    %c0_i32_0 = arith.constant 0 : i32
    %c0_i32_1 = arith.constant 0 : i32
    return %c0_i32, %c0_i32_0 : i32, i32
  }
  func.func @transform_4(%arg0: i32) -> (i32, i32) {
    %c0_i32 = arith.constant 0 : i32
    %c0_i32_0 = arith.constant 0 : i32
    %c0_i32_1 = arith.constant 0 : i32
    return %c0_i32, %c0_i32_0 : i32, i32
  }
  func.func @transform_5(%arg0: i32) -> (i32, i32, i32) {
    %c0_i32 = arith.constant 0 : i32
    %c0_i32_0 = arith.constant 0 : i32
    %c0_i32_1 = arith.constant 0 : i32
    return %arg0, %c0_i32, %c0_i32_0 : i32, i32, i32
  }
}

</mosaic_0001>

<llo_original>
// kernel: inception_block.1
$region0: #{inception_block.1}
  #allocation0 [shape = 'u32[]', space=smem, size = 0x4, offset = 0x4, fixed_abs, tag = 'smem constant byte address 0x4 - core index']
  #allocation1 [shape = 'u32[144,128]{1,0:T(1,128)}', space=vmem, size = 0x12000, scoped, tag = 'internal scratch']
  %s0 = inlined_call_operand.vmem [shape: f32[2,4,256], index: 0, kind: input, shape index: {}]
  %s1 = inlined_call_operand.vmem [shape: f32[8,4], index: 1, kind: input, shape index: {}]
  %s2 = inlined_call_operand.vmem [shape: f32[8,2], index: 2, kind: input, shape index: {}]
  %s3 = inlined_call_operand.vmem [shape: f32[20,216], index: 3, kind: input, shape index: {}]
  %s4 = inlined_call_operand.vmem [shape: f32[20,2], index: 4, kind: input, shape index: {}]
  %s5 = inlined_call_operand.vmem [shape: f32[2,20,256], index: 5, kind: output, shape index: {}]
  %s6 = sld [smem:[#allocation0]]
  $region53: #{inception_block.1} parent=0
    _
  %s8 = ssub.s32 1, %s6
  %s9 = scalar_select 0, %s8, %s6
  loop: start=0, step=1, limit=4
  $region2: #{inception_block.1} parent=0 // loop_pre_header
    _
  $region3: #{inception_block.1} parent=0 // loop_header
    %s11 = sphi 0, %s15
    %p12 = scmp.ge.s32.totalorder %s11, 4
    %s21 = sphi 0, %s23
    %s24 = sphi 0, %s21
    %s25 = sphi 0, %s24
    %s41 = sphi 0, %s25
    %s45 = sphi 0, %s45
    %s47 = sphi 0, %s45
    %s48 = sphi 0, %s47
    %s62 = sphi 0, %s48
    %s66 = sphi 0, %s66
    %s68 = sphi 0, %s66
    %s69 = sphi 0, %s68
    %s83 = sphi 0, %s69
    %s87 = sphi 0, %s87
    %s89 = sphi 0, %s87
    %s90 = sphi 0, %s89
    %s104 = sphi 0, %s90
    %s108 = sphi 0, %s108
    %s110 = sphi 0, %s108
    %s111 = sphi 0, %s110
    %s125 = sphi 0, %s111
    %s131 = sphi 0, %s133
    %s134 = sphi 0, %s131
    %s135 = sphi 0, %s134
    %s151 = sphi 0, %s135
  $region4: #{inception_block.1} parent=0 // loop_header_branch
    %14 = sbr.rel (%p12) target = $region8
  $region5: #{inception_block.1} parent=0 // loop_body
    %s16 = ssub.s32 %s11, 1
    %s17 = ssub.s32 %s11, 2
    %s18 = sadd.s32 %s11, 1
    %s19 = ssub.s32 %s11, %s18
    %p20 = scmp.eq.s32.totalorder %s19, 0
    %s22 = sadd.s32 %s21, 1
    %s23 = scalar_select %p20, %s21, %s22
    %p26 = pneg %p20
    %p27 = scmp.eq.s32.totalorder %s11, 1
    %p28 = por %p26, %p27
    %p29 = scmp.ne.s32.totalorder %s21, %s24
    %p30 = scmp.eq.s32.totalorder %s11, 0
    %p31 = por %p29, %p30
    %p32 = scmp.ne.s32.totalorder %s21, %s24
    %p33 = scmp.eq.s32.totalorder %s16, 1
    %p34 = por %p32, %p33
    %p35 = scmp.ne.s32.totalorder %s24, %s25
    %p36 = scmp.eq.s32.totalorder %s16, 0
    %p37 = por %p35, %p36
    %p38 = scmp.ne.s32.totalorder %s24, %s25
    %p39 = scmp.eq.s32.totalorder %s17, 1
    %p40 = por %p38, %p39
    %p42 = scmp.ne.s32.totalorder %s25, %s41
    %p43 = scmp.eq.s32.totalorder %s17, 0
    %p44 = por %p42, %p43
    %s46 = sadd.s32 %s45, 1
    %p49 = scmp.eq.s32.totalorder %s11, 1
    %p50 = scmp.ne.s32.totalorder %s45, %s47
    %p51 = scmp.eq.s32.totalorder %s11, 0
    %p52 = por %p50, %p51
    %p53 = scmp.ne.s32.totalorder %s45, %s47
    %p54 = scmp.eq.s32.totalorder %s16, 1
    %p55 = por %p53, %p54
    %p56 = scmp.ne.s32.totalorder %s47, %s48
    %p57 = scmp.eq.s32.totalorder %s16, 0
    %p58 = por %p56, %p57
    %p59 = scmp.ne.s32.totalorder %s47, %s48
    %p60 = scmp.eq.s32.totalorder %s17, 1
    %p61 = por %p59, %p60
    %p63 = scmp.ne.s32.totalorder %s48, %s62
    %p64 = scmp.eq.s32.totalorder %s17, 0
    %p65 = por %p63, %p64
    %s67 = sadd.s32 %s66, 1
    %p70 = scmp.eq.s32.totalorder %s11, 1
    %p71 = scmp.ne.s32.totalorder %s66, %s68
    %p72 = scmp.eq.s32.totalorder %s11, 0
    %p73 = por %p71, %p72
    %p74 = scmp.ne.s32.totalorder %s66, %s68
    %p75 = scmp.eq.s32.totalorder %s16, 1
    %p76 = por %p74, %p75
    %p77 = scmp.ne.s32.totalorder %s68, %s69
    %p78 = scmp.eq.s32.totalorder %s16, 0
    %p79 = por %p77, %p78
    %p80 = scmp.ne.s32.totalorder %s68, %s69
    %p81 = scmp.eq.s32.totalorder %s17, 1
    %p82 = por %p80, %p81
    %p84 = scmp.ne.s32.totalorder %s69, %s83
    %p85 = scmp.eq.s32.totalorder %s17, 0
    %p86 = por %p84, %p85
    %s88 = sadd.s32 %s87, 1
    %p91 = scmp.eq.s32.totalorder %s11, 1
    %p92 = scmp.ne.s32.totalorder %s87, %s89
    %p93 = scmp.eq.s32.totalorder %s11, 0
    %p94 = por %p92, %p93
    %p95 = scmp.ne.s32.totalorder %s87, %s89
    %p96 = scmp.eq.s32.totalorder %s16, 1
    %p97 = por %p95, %p96
    %p98 = scmp.ne.s32.totalorder %s89, %s90
    %p99 = scmp.eq.s32.totalorder %s16, 0
    %p100 = por %p98, %p99
    %p101 = scmp.ne.s32.totalorder %s89, %s90
    %p102 = scmp.eq.s32.totalorder %s17, 1
    %p103 = por %p101, %p102
    %p105 = scmp.ne.s32.totalorder %s90, %s104
    %p106 = scmp.eq.s32.totalorder %s17, 0
    %p107 = por %p105, %p106
    %s109 = sadd.s32 %s108, 1
    %p112 = scmp.eq.s32.totalorder %s11, 1
    %p113 = scmp.ne.s32.totalorder %s108, %s110
    %p114 = scmp.eq.s32.totalorder %s11, 0
    %p115 = por %p113, %p114
    %p116 = scmp.ne.s32.totalorder %s108, %s110
    %p117 = scmp.eq.s32.totalorder %s16, 1
    %p118 = por %p116, %p117
    %p119 = scmp.ne.s32.totalorder %s110, %s111
    %p120 = scmp.eq.s32.totalorder %s16, 0
    %p121 = por %p119, %p120
    %p122 = scmp.ne.s32.totalorder %s110, %s111
    %p123 = scmp.eq.s32.totalorder %s17, 1
    %p124 = por %p122, %p123
    %p126 = scmp.ne.s32.totalorder %s111, %s125
    %p127 = scmp.eq.s32.totalorder %s17, 0
    %p128 = por %p126, %p127
    %s129 = ssub.s32 %s11, %s18
    %p130 = scmp.eq.s32.totalorder %s129, 0
    %s132 = sadd.s32 %s131, 1
    %s133 = scalar_select %p130, %s131, %s132
    %p136 = pneg %p130
    %p137 = scmp.eq.s32.totalorder %s11, 1
    %p138 = por %p136, %p137
    %p139 = scmp.ne.s32.totalorder %s131, %s134
    %p140 = scmp.eq.s32.totalorder %s11, 0
    %p141 = por %p139, %p140
    %p142 = scmp.ne.s32.totalorder %s131, %s134
    %p143 = scmp.eq.s32.totalorder %s16, 1
    %p144 = por %p142, %p143
    %p145 = scmp.ne.s32.totalorder %s134, %s135
    %p146 = scmp.eq.s32.totalorder %s16, 0
    %p147 = por %p145, %p146
    %p148 = scmp.ne.s32.totalorder %s134, %s135
    %p149 = scmp.eq.s32.totalorder %s17, 1
    %p150 = por %p148, %p149
    %p152 = scmp.ne.s32.totalorder %s135, %s151
    %p153 = scmp.eq.s32.totalorder %s17, 0
    %p154 = por %p152, %p153
    %p155 = scmp.le.s32.totalorder 1, %s11
    %p156 = scmp.lt.s32.totalorder %s11, 3
    %p157 = pnand %p155, %p156
    %p158 = pneg %p157
    // Predicated region
    $region9: #{inception_block.1} parent=5 // pred_check
      _
    $region10: #{inception_block.1} parent=5 // pred_check_branch
      %160 = sbr.rel (%p157) target = $region12
    $region11: #{inception_block.1} parent=5 // pred_region
      %s161 = ssub.s32 %s11, 1
      // Predicated region
      $region13: #{inception_block.1} parent=11 // pred_check
        %p162 = pneg %p58
      $region14: #{inception_block.1} parent=11 // pred_check_branch
        %164 = sbr.rel (%p162) target = $region16
      $region15: #{inception_block.1} parent=11 // pred_region
        _
      $region16: #{inception_block.1} parent=11 // pred_fallthru
        _
      // Predicated region
      $region17: #{inception_block.1} parent=11 // pred_check
        %p165 = pneg %p79
      $region18: #{inception_block.1} parent=11 // pred_check_branch
        %167 = sbr.rel (%p165) target = $region20
      $region19: #{inception_block.1} parent=11 // pred_region
        _
      $region20: #{inception_block.1} parent=11 // pred_fallthru
        _
      // Predicated region
      $region21: #{inception_block.1} parent=11 // pred_check
        %p168 = pneg %p100
      $region22: #{inception_block.1} parent=11 // pred_check_branch
        %170 = sbr.rel (%p168) target = $region24
      $region23: #{inception_block.1} parent=11 // pred_region
        _
      $region24: #{inception_block.1} parent=11 // pred_fallthru
        _
      // Predicated region
      $region25: #{inception_block.1} parent=11 // pred_check
        %p171 = pneg %p121
      $region26: #{inception_block.1} parent=11 // pred_check_branch
        %173 = sbr.rel (%p171) target = $region28
      $region27: #{inception_block.1} parent=11 // pred_region
        _
      $region28: #{inception_block.1} parent=11 // pred_fallthru
        _
    $region12: #{inception_block.1} parent=5 // pred_fallthru
      _
    %p174 = scmp.lt.s32.totalorder %s11, 2
    // Predicated region
    $region29: #{inception_block.1} parent=5 // pred_check
      %p175 = pneg %p174
    $region30: #{inception_block.1} parent=5 // pred_check_branch
      %177 = sbr.rel (%p175) target = $region32
    $region31: #{inception_block.1} parent=5 // pred_region
      // Predicated region
      $region33: #{inception_block.1} parent=31 // pred_check
        %p178 = pneg %p31
      $region34: #{inception_block.1} parent=31 // pred_check_branch
        %180 = sbr.rel (%p178) target = $region36
      $region35: #{inception_block.1} parent=31 // pred_region
        %p181 = scmp.lt.s32.totalorder %s11, 1
        %s182 = scalar_select %p181, %s11, 1
        %s183 = smul.addr %s182, 2
        %s184 = smul.addr %s183, 4
        %s185 = scalar_lea.vmem %s0, %s184
      $region36: #{inception_block.1} parent=31 // pred_fallthru
        _
    $region32: #{inception_block.1} parent=5 // pred_fallthru
      _
    %p186 = scmp.le.s32.totalorder 1, %s11
    %p187 = scmp.lt.s32.totalorder %s11, 3
    %p188 = pnand %p186, %p187
    %p189 = pneg %p188
    // Predicated region
    $region37: #{inception_block.1} parent=5 // pred_check
      _
    $region38: #{inception_block.1} parent=5 // pred_check_branch
      %191 = sbr.rel (%p188) target = $region40
    $region39: #{inception_block.1} parent=5 // pred_region
      %s192 = ssub.s32 %s11, 1
      %p193 = scmp.lt.s32.totalorder %s16, 1
      %s194 = scalar_select %p193, %s16, 1
      %s195 = smul.addr %s194, 2
      %s196 = smul.addr %s195, 4
      %s197 = scalar_lea.vmem %s0, %s196
      %p198 = pneg %p37
      %p199 = pneg %p34
      %p200 = pneg %p58
      %p201 = pneg %p55
      %p202 = pneg %p79
      %p203 = pneg %p76
      %p204 = pneg %p100
      %p205 = pneg %p97
      %p206 = pneg %p121
      %p207 = pneg %p118
      %p208 = pneg %p147
      %p209 = pneg %p144
      %p210 = scmp.lt.s32.totalorder %s16, 1
      %s211 = scalar_select %p210, %s16, 1
      %s212 = smul.addr %s211, 6
      %s213 = smul.addr %s212, 8
      %s214 = scalar_lea.vmem %s5, %s213
      %p215 = scmp.lt.s32.totalorder %s16, 1
      %s216 = scalar_select %p215, %s16, 1
      %s217 = smul.addr %s216, 2
      %s218 = smul.addr %s217, 4
      %s219 = scalar_lea.vmem %s0, %s218
      %p220 = scmp.lt.s32.totalorder %s16, 1
      %s221 = scalar_select %p220, %s16, 1
      %s222 = smul.addr %s221, 6
      %s223 = smul.addr %s222, 8
      %s224 = scalar_lea.vmem %s5, %s223
      %v225 = vld [vmem:[%s219] sm:$0xff]
      %v227 = vcombine.high %v225, %v225
      %vm229 = vcmask 1043456
      %v230 = vsel %vm229, %v225, 0.0
      %v231 = vsel %vm229, %v227, 0.0
      %v232 = vlaneseq
      %v233 = vand.u32 %v232, 127
      %v234 = vadd.s32 %v233, 128
      %vm235 = vcmp.lt.s32.totalorder %v233, 0
      %v236 = vsub.s32 0, %v233
      %v237 = vsel %vm235, %v236, %v233
      %v238 = vshrl.u32 %v237, 4
      %v239 = vand.u32 %v237, 15
      %v240 = vsub.s32 0, %v239
      %v241 = vsel %vm235, %v240, %v239
      %vm242 = vcmp.lt.s32.totalorder %v234, 0
      %v243 = vsub.s32 0, %v234
      %v244 = vsel %vm242, %v243, %v234
      %v245 = vshrl.u32 %v244, 4
      %v246 = vand.u32 %v244, 15
      %v247 = vsub.s32 0, %v246
      %v248 = vsel %vm242, %v247, %v246
      %vm249 = vcmp.ne.s32.totalorder %v241, 0
      %vm250 = vcmp.ne.s32.totalorder %v248, 0
      %vm251 = vcmp.lt.s32.totalorder %v241, 0
      %vm252 = vcmp.lt.s32.totalorder %v248, 0
      %vm253 = vmand %vm251, %vm249
      %vm254 = vmand %vm252, %vm250
      %v255 = vadd.s32 %v241, 16
      %v256 = vadd.s32 %v248, 16
      %v257 = vsel %vm253, %v255, %v241
      %v258 = vsel %vm254, %v256, %v248
      %v259 = vadd.s32 %v257, 4294967294
      %v260 = vadd.s32 %v258, 4294967294
      %vm261 = vcmp.ge.s32.totalorder %v259, 0
      %vm262 = vcmp.ge.s32.totalorder %v260, 0
      %vm263 = vcmp.lt.s32.totalorder %v259, 16
      %vm264 = vcmp.lt.s32.totalorder %v260, 16
      %vm265 = vmand %vm261, %vm263
      %vm266 = vmand %vm262, %vm264
      %v267 = vadd.s32 %v257, 4294967295
      %v268 = vadd.s32 %v258, 4294967295
      %vm269 = vcmp.ge.s32.totalorder %v267, 0
      %vm270 = vcmp.ge.s32.totalorder %v268, 0
      %vm271 = vcmp.lt.s32.totalorder %v267, 16
      %vm272 = vcmp.lt.s32.totalorder %v268, 16
      %vm273 = vmand %vm269, %vm271
      %vm274 = vmand %vm270, %vm272
      %v275 = vadd.s32 %v257, 1
      %v276 = vadd.s32 %v258, 1
      %vm277 = vcmp.ge.s32.totalorder %v275, 0
      %vm278 = vcmp.ge.s32.totalorder %v276, 0
      %vm279 = vcmp.lt.s32.totalorder %v275, 16
      %vm280 = vcmp.lt.s32.totalorder %v276, 16
      %vm281 = vmand %vm277, %vm279
      %vm282 = vmand %vm278, %vm280
      %v283 = vadd.s32 %v257, 2
      %v284 = vadd.s32 %v258, 2
      %vm285 = vcmp.ge.s32.totalorder %v283, 0
      %vm286 = vcmp.ge.s32.totalorder %v284, 0
      %vm287 = vcmp.lt.s32.totalorder %v283, 16
      %vm288 = vcmp.lt.s32.totalorder %v284, 16
      %vm289 = vmand %vm285, %vm287
      %vm290 = vmand %vm286, %vm288
      %v291 = vld [vmem:[%s1] sm:$0xff]
      %vm292 = vcmask 31744
      %v294 = vsel %vm292, %v291, 0
      %v296 = vsel %vm229, %v225, 0
      %v298 = vsel %vm229, %v227, 0
      %300 = vmatprep.subr.mxu0 0.0
      %301 = vmatpush1.msra.mxu0 0.0
      %302 = vmatprep.subr.mxu0 0.0
      %303 = vmatpush1.msra.mxu0 0.0
      %304 = vmatprep.subr.mxu0 0.0
      %305 = vmatpush1.msra.mxu0 0.0
      %306 = vmatprep.subr.mxu0 0.0
      %307 = vmatpush1.msra.mxu0 0.0
      %308 = vmatprep.subr.mxu0 0.0
      %309 = vmatpush1.msra.mxu0 0.0
      %310 = vmatprep.subr.mxu0 0.0
      %311 = vmatpush1.msra.mxu0 0.0
      %312 = vmatprep.subr.mxu0 0.0
      %313 = vmatpush1.msra.mxu0 0.0
      %314 = vmatprep.subr.mxu0 0.0
      %315 = vmatpush1.msra.mxu0 0.0
      %316 = vmatprep.subr.mxu0 0.0
      %317 = vmatpush1.msra.mxu0 0.0
      %318 = vmatprep.subr.mxu0 0.0
      %319 = vmatpush1.msra.mxu0 0.0
      %320 = vmatprep.subr.mxu0 0.0
      %321 = vmatpush1.msra.mxu0 0.0
      %322 = vmatprep.subr.mxu0 0.0
      %323 = vmatpush1.msra.mxu0 0.0
      %324 = vmatprep.subr.mxu0 0.0
      %325 = vmatpush1.msra.mxu0 0.0
      %326 = vmatprep.subr.mxu0 0.0
      %327 = vmatpush1.msra.mxu0 0.0
      %328 = vmatprep.subr.mxu0 0.0
      %329 = vmatpush1.msra.mxu0 0.0
      %330 = vmatprep.subr.mxu0 %v298
      %331 = vmatpush1.msra.mxu0 %v296
      %332 = vmatprep.subr.mxu0 0.0
      %333 = vmatpush2.msra.mxu0 0.0
      %334 = vmatprep.subr.mxu0 0.0
      %335 = vmatpush2.msra.mxu0 0.0
      %336 = vmatprep.subr.mxu0 0.0
      %337 = vmatpush2.msra.mxu0 0.0
      %338 = vmatprep.subr.mxu0 0.0
      %339 = vmatpush2.msra.mxu0 0.0
      %340 = vmatprep.subr.mxu0 0.0
      %341 = vmatpush2.msra.mxu0 0.0
      %342 = vmatprep.subr.mxu0 0.0
      %343 = vmatpush2.msra.mxu0 0.0
      %344 = vmatprep.subr.mxu0 0.0
      %345 = vmatpush2.msra.mxu0 0.0
      %346 = vmatprep.subr.mxu0 0.0
      %347 = vmatpush2.msra.mxu0 0.0
      %348 = vmatprep.subr.mxu0 0.0
      %349 = vmatpush2.msra.mxu0 0.0
      %350 = vmatprep.subr.mxu0 0.0
      %351 = vmatpush2.msra.mxu0 0.0
      %352 = vmatprep.subr.mxu0 0.0
      %353 = vmatpush2.msra.mxu0 0.0
      %354 = vmatprep.subr.mxu0 0.0
      %355 = vmatpush2.msra.mxu0 0.0
      %356 = vmatprep.subr.mxu0 0.0
      %357 = vmatpush2.msra.mxu0 0.0
      %358 = vmatprep.subr.mxu0 0.0
      %359 = vmatpush2.msra.mxu0 0.0
      %360 = vmatprep.subr.mxu0 0.0
      %361 = vmatpush2.msra.mxu0 0.0
      %362 = vmatprep.subr.mxu0 0.0
      %363 = vmatpush2.msra.mxu0 0.0
      %364 = vmatprep.mubr.f32.mxu0 0.0
      %365 = vmatmul.mubr.f32.gmra.mxu0 %v294
      %v366 = vpop.f32.mrf.mxu0
      %v367 = vadd.f32 0.0, %v366
      %v368 = vpop.f32.mrf.mxu0
      %v369 = vadd.f32 0.0, %v368
      %370 = vdwg.mxu0
      %v371 = vld [vmem:[%s2] sm:$0xff]
      %373 = vset.pattern.permute.xlu0 0
      %374 = vperm.xlu0 %373, %v371
      %v375 = vpop.permute.xlu0 %374
      %v377 = vmul.f32 %v367, %v375
      %v378 = vmul.f32 %v369, %v375
      %379 = vset.pattern.permute.xlu0 1
      %380 = vperm.xlu0 %379, %v371
      %v381 = vpop.permute.xlu0 %380
      %v383 = vadd.f32 %v377, %v381
      %v384 = vadd.f32 %v378, %v381
      %v385 = vmax.f32 %v383, 0.0
      %v386 = vmax.f32 %v384, 0.0
      %v387 = vsel %vm273, 1, 0
      %v388 = vsel %vm274, 1, 0
      %vm389 = vcmp.eq.s32.totalorder %v387, 1
      %vm390 = vcmp.eq.s32.totalorder %v388, 1
      %394 = vrot.lane.b32.xlu0 -inf, 17
      %v395 = vpop.permute.xlu0 %394
      %396 = vrot.lane.b32.xlu0 %v230, 17
      %v397 = vpop.permute.xlu0 %396
      %398 = vrot.lane.b32.xlu0 %v231, 17
      %v399 = vpop.permute.xlu0 %398
      %vm400 = vcmask 138240
      %v401 = vsel %vm400, %v395, %v397
      %v402 = vsel %vm400, %v397, %v399
      %v405 = vsel %vm389, %v401, -inf
      %v406 = vsel %vm390, %v402, -inf
      %v407 = vmax.f32 %v230, %v405
      %v408 = vmax.f32 %v231, %v406
      %409 = vrot.lane.b32.xlu0 -inf, 16
      %v410 = vpop.permute.xlu0 %409
      %411 = vrot.lane.b32.xlu0 %v230, 16
      %v412 = vpop.permute.xlu0 %411
      %413 = vrot.lane.b32.xlu0 %v231, 16
      %v414 = vpop.permute.xlu0 %413
      %vm415 = vcmask 130048
      %v416 = vsel %vm415, %v410, %v412
      %v417 = vsel %vm415, %v412, %v414
      %v420 = vmax.f32 %v407, %v416
      %v421 = vmax.f32 %v408, %v417
      %v422 = vsel %vm281, 1, 0
      %v423 = vsel %vm282, 1, 0
      %vm424 = vcmp.eq.s32.totalorder %v422, 1
      %vm425 = vcmp.eq.s32.totalorder %v423, 1
      %426 = vrot.lane.b32.xlu0 -inf, 15
      %v427 = vpop.permute.xlu0 %426
      %428 = vrot.lane.b32.xlu0 %v230, 15
      %v429 = vpop.permute.xlu0 %428
      %430 = vrot.lane.b32.xlu0 %v231, 15
      %v431 = vpop.permute.xlu0 %430
      %vm432 = vcmask 121856
      %v433 = vsel %vm432, %v427, %v429
      %v434 = vsel %vm432, %v429, %v431
      %v437 = vsel %vm424, %v433, -inf
      %v438 = vsel %vm425, %v434, -inf
      %v439 = vmax.f32 %v420, %v437
      %v440 = vmax.f32 %v421, %v438
      %441 = vrot.lane.b32.xlu0 -inf, 1
      %v442 = vpop.permute.xlu0 %441
      %443 = vrot.lane.b32.xlu0 %v230, 1
      %v444 = vpop.permute.xlu0 %443
      %445 = vrot.lane.b32.xlu0 %v231, 1
      %v446 = vpop.permute.xlu0 %445
      %vm447 = vcmask 7168
      %v448 = vsel %vm447, %v442, %v444
      %v449 = vsel %vm447, %v444, %v446
      %v452 = vsel %vm389, %v448, -inf
      %v453 = vsel %vm390, %v449, -inf
      %v454 = vmax.f32 %v439, %v452
      %v455 = vmax.f32 %v440, %v453
      %456 = vrot.lane.b32.xlu0 %v230, 127
      %v457 = vpop.permute.xlu0 %456
      %458 = vrot.lane.b32.xlu0 %v231, 127
      %v459 = vpop.permute.xlu0 %458
      %460 = vrot.lane.b32.xlu0 -inf, 127
      %v461 = vpop.permute.xlu0 %460
      %vm462 = vcmask 1039360
      %v463 = vsel %vm462, %v457, %v459
      %v464 = vsel %vm462, %v459, %v461
      %v467 = vsel %vm424, %v463, -inf
      %v468 = vsel %vm425, %v464, -inf
      %v469 = vmax.f32 %v454, %v467
      %v470 = vmax.f32 %v455, %v468
      %471 = vrot.lane.b32.xlu0 %v230, 113
      %v472 = vpop.permute.xlu0 %471
      %473 = vrot.lane.b32.xlu0 %v231, 113
      %v474 = vpop.permute.xlu0 %473
      %475 = vrot.lane.b32.xlu0 -inf, 113
      %v476 = vpop.permute.xlu0 %475
      %vm477 = vcmask 924672
      %v478 = vsel %vm477, %v472, %v474
      %v479 = vsel %vm477, %v474, %v476
      %v482 = vsel %vm389, %v478, -inf
      %v483 = vsel %vm390, %v479, -inf
      %v484 = vmax.f32 %v469, %v482
      %v485 = vmax.f32 %v470, %v483
      %486 = vrot.lane.b32.xlu0 %v230, 112
      %v487 = vpop.permute.xlu0 %486
      %488 = vrot.lane.b32.xlu0 %v231, 112
      %v489 = vpop.permute.xlu0 %488
      %490 = vrot.lane.b32.xlu0 -inf, 112
      %v491 = vpop.permute.xlu0 %490
      %vm492 = vcmask 916480
      %v493 = vsel %vm492, %v487, %v489
      %v494 = vsel %vm492, %v489, %v491
      %v497 = vmax.f32 %v484, %v493
      %v498 = vmax.f32 %v485, %v494
      %499 = vrot.lane.b32.xlu0 %v230, 111
      %v500 = vpop.permute.xlu0 %499
      %501 = vrot.lane.b32.xlu0 %v231, 111
      %v502 = vpop.permute.xlu0 %501
      %503 = vrot.lane.b32.xlu0 -inf, 111
      %v504 = vpop.permute.xlu0 %503
      %vm505 = vcmask 908288
      %v506 = vsel %vm505, %v500, %v502
      %v507 = vsel %vm505, %v502, %v504
      %v510 = vsel %vm424, %v506, -inf
      %v511 = vsel %vm425, %v507, -inf
      %v512 = vmax.f32 %v497, %v510
      %v513 = vmax.f32 %v498, %v511
      %v514 = vsel %vm265, 1, 0
      %v515 = vsel %vm266, 1, 0
      %vm516 = vcmp.eq.s32.totalorder %v514, 1
      %vm517 = vcmp.eq.s32.totalorder %v515, 1
      %521 = vrot.lane.b32.xlu0 0.0, 34
      %v522 = vpop.permute.xlu0 %521
      %523 = vrot.lane.b32.xlu0 %v385, 34
      %v524 = vpop.permute.xlu0 %523
      %525 = vrot.lane.b32.xlu0 %v386, 34
      %v526 = vpop.permute.xlu0 %525
      %vm527 = vcmask 277504
      %v528 = vsel %vm527, %v522, %v524
      %v529 = vsel %vm527, %v524, %v526
      %v532 = vsel %vm516, %v528, 0.0
      %v533 = vsel %vm517, %v529, 0.0
      %534 = vrot.lane.b32.xlu0 0.0, 33
      %v535 = vpop.permute.xlu0 %534
      %536 = vrot.lane.b32.xlu0 %v385, 33
      %v537 = vpop.permute.xlu0 %536
      %538 = vrot.lane.b32.xlu0 %v386, 33
      %v539 = vpop.permute.xlu0 %538
      %vm540 = vcmask 269312
      %v541 = vsel %vm540, %v535, %v537
      %v542 = vsel %vm540, %v537, %v539
      %v545 = vsel %vm389, %v541, 0.0
      %v546 = vsel %vm390, %v542, 0.0
      %547 = vrot.lane.b32.xlu0 0.0, 31
      %v548 = vpop.permute.xlu0 %547
      %549 = vrot.lane.b32.xlu0 %v385, 31
      %v550 = vpop.permute.xlu0 %549
      %551 = vrot.lane.b32.xlu0 %v386, 31
      %v552 = vpop.permute.xlu0 %551
      %vm553 = vcmask 252928
      %v554 = vsel %vm553, %v548, %v550
      %v555 = vsel %vm553, %v550, %v552
      %v558 = vsel %vm424, %v554, 0.0
      %v559 = vsel %vm425, %v555, 0.0
      %v560 = vsel %vm289, 1, 0
      %v561 = vsel %vm290, 1, 0
      %vm562 = vcmp.eq.s32.totalorder %v560, 1
      %vm563 = vcmp.eq.s32.totalorder %v561, 1
      %564 = vrot.lane.b32.xlu0 0.0, 30
      %v565 = vpop.permute.xlu0 %564
      %566 = vrot.lane.b32.xlu0 %v385, 30
      %v567 = vpop.permute.xlu0 %566
      %568 = vrot.lane.b32.xlu0 %v386, 30
      %v569 = vpop.permute.xlu0 %568
      %vm570 = vcmask 244736
      %v571 = vsel %vm570, %v565, %v567
      %v572 = vsel %vm570, %v567, %v569
      %v575 = vsel %vm562, %v571, 0.0
      %v576 = vsel %vm563, %v572, 0.0
      %577 = vrot.lane.b32.xlu0 0.0, 18
      %v578 = vpop.permute.xlu0 %577
      %579 = vrot.lane.b32.xlu0 %v385, 18
      %v580 = vpop.permute.xlu0 %579
      %581 = vrot.lane.b32.xlu0 %v386, 18
      %v582 = vpop.permute.xlu0 %581
      %vm583 = vcmask 146432
      %v584 = vsel %vm583, %v578, %v580
      %v585 = vsel %vm583, %v580, %v582
      %v588 = vsel %vm516, %v584, 0.0
      %v589 = vsel %vm517, %v585, 0.0
      %590 = vrot.lane.b32.xlu0 0.0, 17
      %v591 = vpop.permute.xlu0 %590
      %592 = vrot.lane.b32.xlu0 %v385, 17
      %v593 = vpop.permute.xlu0 %592
      %594 = vrot.lane.b32.xlu0 %v386, 17
      %v595 = vpop.permute.xlu0 %594
      %v596 = vsel %vm400, %v591, %v593
      %v597 = vsel %vm400, %v593, %v595
      %v600 = vsel %vm389, %v596, 0.0
      %v601 = vsel %vm390, %v597, 0.0
      %602 = vrot.lane.b32.xlu0 0.0, 15
      %v603 = vpop.permute.xlu0 %602
      %604 = vrot.lane.b32.xlu0 %v385, 15
      %v605 = vpop.permute.xlu0 %604
      %606 = vrot.lane.b32.xlu0 %v386, 15
      %v607 = vpop.permute.xlu0 %606
      %v608 = vsel %vm432, %v603, %v605
      %v609 = vsel %vm432, %v605, %v607
      %v612 = vsel %vm424, %v608, 0.0
      %v613 = vsel %vm425, %v609, 0.0
      %614 = vrot.lane.b32.xlu0 0.0, 14
      %v615 = vpop.permute.xlu0 %614
      %616 = vrot.lane.b32.xlu0 %v385, 14
      %v617 = vpop.permute.xlu0 %616
      %618 = vrot.lane.b32.xlu0 %v386, 14
      %v619 = vpop.permute.xlu0 %618
      %vm620 = vcmask 113664
      %v621 = vsel %vm620, %v615, %v617
      %v622 = vsel %vm620, %v617, %v619
      %v625 = vsel %vm562, %v621, 0.0
      %v626 = vsel %vm563, %v622, 0.0
      %627 = vrot.lane.b32.xlu0 0.0, 2
      %v628 = vpop.permute.xlu0 %627
      %629 = vrot.lane.b32.xlu0 %v385, 2
      %v630 = vpop.permute.xlu0 %629
      %631 = vrot.lane.b32.xlu0 %v386, 2
      %v632 = vpop.permute.xlu0 %631
      %vm633 = vcmask 15360
      %v634 = vsel %vm633, %v628, %v630
      %v635 = vsel %vm633, %v630, %v632
      %v638 = vsel %vm516, %v634, 0.0
      %v639 = vsel %vm517, %v635, 0.0
      %640 = vrot.lane.b32.xlu0 0.0, 1
      %v641 = vpop.permute.xlu0 %640
      %642 = vrot.lane.b32.xlu0 %v385, 1
      %v643 = vpop.permute.xlu0 %642
      %644 = vrot.lane.b32.xlu0 %v386, 1
      %v645 = vpop.permute.xlu0 %644
      %v646 = vsel %vm447, %v641, %v643
      %v647 = vsel %vm447, %v643, %v645
      %v650 = vsel %vm389, %v646, 0.0
      %v651 = vsel %vm390, %v647, 0.0
      %652 = vrot.lane.b32.xlu0 %v385, 127
      %v653 = vpop.permute.xlu0 %652
      %654 = vrot.lane.b32.xlu0 %v386, 127
      %v655 = vpop.permute.xlu0 %654
      %656 = vrot.lane.b32.xlu0 0.0, 127
      %v657 = vpop.permute.xlu0 %656
      %v658 = vsel %vm462, %v653, %v655
      %v659 = vsel %vm462, %v655, %v657
      %v662 = vsel %vm424, %v658, 0.0
      %v663 = vsel %vm425, %v659, 0.0
      %664 = vrot.lane.b32.xlu0 %v385, 126
      %v665 = vpop.permute.xlu0 %664
      %666 = vrot.lane.b32.xlu0 %v386, 126
      %v667 = vpop.permute.xlu0 %666
      %668 = vrot.lane.b32.xlu0 0.0, 126
      %v669 = vpop.permute.xlu0 %668
      %vm670 = vcmask 1031168
      %v671 = vsel %vm670, %v665, %v667
      %v672 = vsel %vm670, %v667, %v669
      %v675 = vsel %vm562, %v671, 0.0
      %v676 = vsel %vm563, %v672, 0.0
      %677 = vrot.lane.b32.xlu0 %v385, 114
      %v678 = vpop.permute.xlu0 %677
      %679 = vrot.lane.b32.xlu0 %v386, 114
      %v680 = vpop.permute.xlu0 %679
      %681 = vrot.lane.b32.xlu0 0.0, 114
      %v682 = vpop.permute.xlu0 %681
      %vm683 = vcmask 932864
      %v684 = vsel %vm683, %v678, %v680
      %v685 = vsel %vm683, %v680, %v682
      %v688 = vsel %vm516, %v684, 0.0
      %v689 = vsel %vm517, %v685, 0.0
      %690 = vrot.lane.b32.xlu0 %v385, 113
      %v691 = vpop.permute.xlu0 %690
      %692 = vrot.lane.b32.xlu0 %v386, 113
      %v693 = vpop.permute.xlu0 %692
      %694 = vrot.lane.b32.xlu0 0.0, 113
      %v695 = vpop.permute.xlu0 %694
      %v696 = vsel %vm477, %v691, %v693
      %v697 = vsel %vm477, %v693, %v695
      %v700 = vsel %vm389, %v696, 0.0
      %v701 = vsel %vm390, %v697, 0.0
      %702 = vrot.lane.b32.xlu0 %v385, 111
      %v703 = vpop.permute.xlu0 %702
      %704 = vrot.lane.b32.xlu0 %v386, 111
      %v705 = vpop.permute.xlu0 %704
      %706 = vrot.lane.b32.xlu0 0.0, 111
      %v707 = vpop.permute.xlu0 %706
      %v708 = vsel %vm505, %v703, %v705
      %v709 = vsel %vm505, %v705, %v707
      %v712 = vsel %vm424, %v708, 0.0
      %v713 = vsel %vm425, %v709, 0.0
      %714 = vrot.lane.b32.xlu0 %v385, 110
      %v715 = vpop.permute.xlu0 %714
      %716 = vrot.lane.b32.xlu0 %v386, 110
      %v717 = vpop.permute.xlu0 %716
      %718 = vrot.lane.b32.xlu0 0.0, 110
      %v719 = vpop.permute.xlu0 %718
      %vm720 = vcmask 900096
      %v721 = vsel %vm720, %v715, %v717
      %v722 = vsel %vm720, %v717, %v719
      %v725 = vsel %vm562, %v721, 0.0
      %v726 = vsel %vm563, %v722, 0.0
      %727 = vrot.lane.b32.xlu0 %v385, 98
      %v728 = vpop.permute.xlu0 %727
      %729 = vrot.lane.b32.xlu0 %v386, 98
      %v730 = vpop.permute.xlu0 %729
      %731 = vrot.lane.b32.xlu0 0.0, 98
      %v732 = vpop.permute.xlu0 %731
      %vm733 = vcmask 801792
      %v734 = vsel %vm733, %v728, %v730
      %v735 = vsel %vm733, %v730, %v732
      %v738 = vsel %vm516, %v734, 0.0
      %v739 = vsel %vm517, %v735, 0.0
      %740 = vrot.lane.b32.xlu0 %v385, 97
      %v741 = vpop.permute.xlu0 %740
      %742 = vrot.lane.b32.xlu0 %v386, 97
      %v743 = vpop.permute.xlu0 %742
      %744 = vrot.lane.b32.xlu0 0.0, 97
      %v745 = vpop.permute.xlu0 %744
      %vm746 = vcmask 793600
      %v747 = vsel %vm746, %v741, %v743
      %v748 = vsel %vm746, %v743, %v745
      %v751 = vsel %vm389, %v747, 0.0
      %v752 = vsel %vm390, %v748, 0.0
      %753 = vrot.lane.b32.xlu0 %v385, 95
      %v754 = vpop.permute.xlu0 %753
      %755 = vrot.lane.b32.xlu0 %v386, 95
      %v756 = vpop.permute.xlu0 %755
      %757 = vrot.lane.b32.xlu0 0.0, 95
      %v758 = vpop.permute.xlu0 %757
      %vm759 = vcmask 777216
      %v760 = vsel %vm759, %v754, %v756
      %v761 = vsel %vm759, %v756, %v758
      %v764 = vsel %vm424, %v760, 0.0
      %v765 = vsel %vm425, %v761, 0.0
      %766 = vrot.lane.b32.xlu0 %v385, 94
      %v767 = vpop.permute.xlu0 %766
      %768 = vrot.lane.b32.xlu0 %v386, 94
      %v769 = vpop.permute.xlu0 %768
      %770 = vrot.lane.b32.xlu0 0.0, 94
      %v771 = vpop.permute.xlu0 %770
      %vm772 = vcmask 769024
      %v773 = vsel %vm772, %v767, %v769
      %v774 = vsel %vm772, %v769, %v771
      %v777 = vsel %vm562, %v773, 0.0
      %v778 = vsel %vm563, %v774, 0.0
      %779 = vrot.lane.b32.xlu0 0.0, 32
      %v780 = vpop.permute.xlu0 %779
      %781 = vrot.lane.b32.xlu0 %v385, 32
      %v782 = vpop.permute.xlu0 %781
      %783 = vrot.lane.b32.xlu0 %v386, 32
      %v784 = vpop.permute.xlu0 %783
      %vm785 = vcmask 261120
      %v786 = vsel %vm785, %v780, %v782
      %v787 = vsel %vm785, %v782, %v784
      %790 = vrot.lane.b32.xlu0 0.0, 16
      %v791 = vpop.permute.xlu0 %790
      %792 = vrot.lane.b32.xlu0 %v385, 16
      %v793 = vpop.permute.xlu0 %792
      %794 = vrot.lane.b32.xlu0 %v386, 16
      %v795 = vpop.permute.xlu0 %794
      %v796 = vsel %vm415, %v791, %v793
      %v797 = vsel %vm415, %v793, %v795
      %800 = vrot.lane.b32.xlu0 %v385, 112
      %v801 = vpop.permute.xlu0 %800
      %802 = vrot.lane.b32.xlu0 %v386, 112
      %v803 = vpop.permute.xlu0 %802
      %804 = vrot.lane.b32.xlu0 0.0, 112
      %v805 = vpop.permute.xlu0 %804
      %v806 = vsel %vm492, %v801, %v803
      %v807 = vsel %vm492, %v803, %v805
      %810 = vrot.lane.b32.xlu0 %v385, 96
      %v811 = vpop.permute.xlu0 %810
      %812 = vrot.lane.b32.xlu0 %v386, 96
      %v813 = vpop.permute.xlu0 %812
      %814 = vrot.lane.b32.xlu0 0.0, 96
      %v815 = vpop.permute.xlu0 %814
      %vm816 = vcmask 785408
      %v817 = vsel %vm816, %v811, %v813
      %v818 = vsel %vm816, %v813, %v815
      %v821 = vld [vmem:[%s3] sm:$0xff]
      %v822 = vld [vmem:[%s3 + $0x8] sm:$0xff]
      %v823 = vld [vmem:[%s3 + $0x10] sm:$0xff]
      %v824 = vld [vmem:[%s3 + $0x18] sm:$0xff]
      %v825 = vld [vmem:[%s3 + $0x20] sm:$0xf]
      %v826 = vld [vmem:[%s3 + $0x28] sm:$0xf]
      %vm827 = vcmask 719872
      %v829 = vsel %vm827, %v822, 0
      %v832 = vsel %vm827, %v824, 0
      %v835 = vsel %vm827, %v826, 0
      %837 = vmatprep.subr.mxu0 %v663
      %838 = vmatpush1.msra.mxu0 %v662
      %839 = vmatprep.subr.mxu0 %v386
      %840 = vmatpush1.msra.mxu0 %v385
      %841 = vmatprep.subr.mxu0 %v651
      %842 = vmatpush1.msra.mxu0 %v650
      %843 = vmatprep.subr.mxu0 %v639
      %844 = vmatpush1.msra.mxu0 %v638
      %845 = vmatprep.subr.mxu0 %v626
      %846 = vmatpush1.msra.mxu0 %v625
      %847 = vmatprep.subr.mxu0 %v613
      %848 = vmatpush1.msra.mxu0 %v612
      %849 = vmatprep.subr.mxu0 %v797
      %850 = vmatpush1.msra.mxu0 %v796
      %851 = vmatprep.subr.mxu0 %v601
      %852 = vmatpush1.msra.mxu0 %v600
      %853 = vmatprep.subr.mxu0 %v589
      %854 = vmatpush1.msra.mxu0 %v588
      %855 = vmatprep.subr.mxu0 %v576
      %856 = vmatpush1.msra.mxu0 %v575
      %857 = vmatprep.subr.mxu0 %v559
      %858 = vmatpush1.msra.mxu0 %v558
      %859 = vmatprep.subr.mxu0 %v787
      %860 = vmatpush1.msra.mxu0 %v786
      %861 = vmatprep.subr.mxu0 %v546
      %862 = vmatpush1.msra.mxu0 %v545
      %863 = vmatprep.subr.mxu0 %v533
      %864 = vmatpush1.msra.mxu0 %v532
      %865 = vmatprep.subr.mxu0 %v513
      %866 = vmatpush1.msra.mxu0 %v512
      %867 = vmatprep.subr.mxu0 %v231
      %868 = vmatpush1.msra.mxu0 %v230
      %869 = vmatprep.subr.mxu0 0.0
      %870 = vmatpush2.msra.mxu0 0.0
      %871 = vmatprep.subr.mxu0 0.0
      %872 = vmatpush2.msra.mxu0 0.0
      %873 = vmatprep.subr.mxu0 0.0
      %874 = vmatpush2.msra.mxu0 0.0
      %875 = vmatprep.subr.mxu0 0.0
      %876 = vmatpush2.msra.mxu0 0.0
      %877 = vmatprep.subr.mxu0 0.0
      %878 = vmatpush2.msra.mxu0 0.0
      %879 = vmatprep.subr.mxu0 %v778
      %880 = vmatpush2.msra.mxu0 %v777
      %881 = vmatprep.subr.mxu0 %v765
      %882 = vmatpush2.msra.mxu0 %v764
      %883 = vmatprep.subr.mxu0 %v818
      %884 = vmatpush2.msra.mxu0 %v817
      %885 = vmatprep.subr.mxu0 %v752
      %886 = vmatpush2.msra.mxu0 %v751
      %887 = vmatprep.subr.mxu0 %v739
      %888 = vmatpush2.msra.mxu0 %v738
      %889 = vmatprep.subr.mxu0 %v726
      %890 = vmatpush2.msra.mxu0 %v725
      %891 = vmatprep.subr.mxu0 %v713
      %892 = vmatpush2.msra.mxu0 %v712
      %893 = vmatprep.subr.mxu0 %v807
      %894 = vmatpush2.msra.mxu0 %v806
      %895 = vmatprep.subr.mxu0 %v701
      %896 = vmatpush2.msra.mxu0 %v700
      %897 = vmatprep.subr.mxu0 %v689
      %898 = vmatpush2.msra.mxu0 %v688
      %899 = vmatprep.subr.mxu0 %v676
      %900 = vmatpush2.msra.mxu0 %v675
      %901 = vmatprep.mubr.f32.mxu0 %v829
      %902 = vmatmul.mubr.f32.gmra.mxu0 %v821
      %v903 = vpop.f32.mrf.mxu0
      %v904 = vadd.f32 0.0, %v903
      %v905 = vpop.f32.mrf.mxu0
      %v906 = vadd.f32 0.0, %v905
      %907 = vmatprep.mubr.f32.mxu0 %v832
      %908 = vmatmul.mubr.f32.gmra.mxu0 %v823
      %v909 = vpop.f32.mrf.mxu0
      %v910 = vadd.f32 0.0, %v909
      %v911 = vpop.f32.mrf.mxu0
      %v912 = vadd.f32 0.0, %v911
      %913 = vmatprep.mubr.f32.mxu0 %v835
      %914 = vmatmul.mubr.f32.gmra.mxu0 %v825
      %v915 = vpop.f32.mrf.mxu0
      %v916 = vadd.f32 0.0, %v915
      %v917 = vpop.f32.mrf.mxu0
      %v918 = vadd.f32 0.0, %v917
      %919 = vdwg.mxu0
      %v920 = vld [vmem:[%s4] sm:$0xff]
      %v921 = vld [vmem:[%s4 + $0x8] sm:$0xff]
      %v922 = vld [vmem:[%s4 + $0x10] sm:$0xf]
      %924 = vset.pattern.permute.xlu0 0
      %925 = vperm.xlu0 %924, %v920
      %v926 = vpop.permute.xlu0 %925
      %929 = vset.pattern.permute.xlu0 0
      %930 = vperm.xlu0 %929, %v921
      %v931 = vpop.permute.xlu0 %930
      %934 = vset.pattern.permute.xlu0 0
      %935 = vperm.xlu0 %934, %v922
      %v936 = vpop.permute.xlu0 %935
      %v938 = vmul.f32 %v904, %v926
      %v939 = vmul.f32 %v906, %v926
      %v940 = vmul.f32 %v910, %v931
      %v941 = vmul.f32 %v912, %v931
      %v942 = vmul.f32 %v916, %v936
      %v943 = vmul.f32 %v918, %v936
      %944 = vset.pattern.permute.xlu0 1
      %945 = vperm.xlu0 %944, %v920
      %v946 = vpop.permute.xlu0 %945
      %948 = vset.pattern.permute.xlu0 1
      %949 = vperm.xlu0 %948, %v921
      %v950 = vpop.permute.xlu0 %949
      %952 = vset.pattern.permute.xlu0 1
      %953 = vperm.xlu0 %952, %v922
      %v954 = vpop.permute.xlu0 %953
      %v956 = vadd.f32 %v938, %v946
      %v957 = vadd.f32 %v939, %v946
      %v958 = vadd.f32 %v940, %v950
      %v959 = vadd.f32 %v941, %v950
      %v960 = vadd.f32 %v942, %v954
      %v961 = vadd.f32 %v943, %v954
      %v962 = vmax.f32 %v956, 0.0
      %v963 = vmax.f32 %v957, 0.0
      %v964 = vmax.f32 %v958, 0.0
      %v965 = vmax.f32 %v959, 0.0
      %v966 = vmax.f32 %v960, 0.0
      %v967 = vmax.f32 %v961, 0.0
      %968 = vst [vmem:[%s224] sm:$0xff] %v962
      %969 = vst [vmem:[%s224 + $0x8] sm:$0xff] %v963
      %970 = vst [vmem:[%s224 + $0x10] sm:$0xff] %v964
      %971 = vst [vmem:[%s224 + $0x18] sm:$0xff] %v965
      %972 = vst [vmem:[%s224 + $0x20] sm:$0xf] %v966
      %973 = vst [vmem:[%s224 + $0x28] sm:$0xf] %v967
      %p974 = scmp.lt.s32.totalorder %s16, 1
      %s975 = scalar_select %p974, %s16, 1
      %s976 = smul.addr %s975, 6
      %s977 = smul.addr %s976, 8
      %s978 = scalar_lea.vmem %s5, %s977
      // Predicated region
      $region41: #{inception_block.1} parent=39 // pred_check
        %p979 = pneg %p144
      $region42: #{inception_block.1} parent=39 // pred_check_branch
        %981 = sbr.rel (%p979) target = $region44
      $region43: #{inception_block.1} parent=39 // pred_region
        _
      $region44: #{inception_block.1} parent=39 // pred_fallthru
        _
    $region40: #{inception_block.1} parent=5 // pred_fallthru
      _
    %p982 = scmp.le.s32.totalorder 2, %s11
    // Predicated region
    $region45: #{inception_block.1} parent=5 // pred_check
      %p983 = pneg %p982
    $region46: #{inception_block.1} parent=5 // pred_check_branch
      %985 = sbr.rel (%p983) target = $region48
    $region47: #{inception_block.1} parent=5 // pred_region
      %s986 = ssub.s32 %s11, 2
      // Predicated region
      $region49: #{inception_block.1} parent=47 // pred_check
        %p987 = pneg %p150
      $region50: #{inception_block.1} parent=47 // pred_check_branch
        %989 = sbr.rel (%p987) target = $region52
      $region51: #{inception_block.1} parent=47 // pred_region
        %p990 = scmp.lt.s32.totalorder %s17, 1
        %s991 = scalar_select %p990, %s17, 1
        %s992 = smul.addr %s991, 6
        %s993 = smul.addr %s992, 8
        %s994 = scalar_lea.vmem %s5, %s993
      $region52: #{inception_block.1} parent=47 // pred_fallthru
        _
    $region48: #{inception_block.1} parent=5 // pred_fallthru
      _
  $region6: #{inception_block.1} parent=0 // loop_footer
    %s15 = sadd.s32 1, %s11
  $region7: #{inception_block.1} parent=0 // loop_footer_branch
    %10 = sbr.rel target = $region3
  $region8: #{inception_block.1} parent=0 // loop_exit
    _

</llo_original>
